<compile_context>
chip_gen: v7x
topology: tpu7x:2x2x1
jax: 0.10.0
libtpu: 0.0.40
codegen_flags: <defaults>
</compile_context>

<pallas_src>
import functools

import jax
import jax.numpy as jnp
from jax.experimental import pallas as pl
from jax.experimental.pallas import tpu as pltpu

LANE = 128
SUBLANE = 8
MAX_BLOCK_ROWS = 512  # 512x128 f32 = 256 KiB per tile; fits all generations.


def _round_up(v, m):
    return (v + m - 1) // m * m


# ---------------------------------------------------------------------------
# Kernels
# ---------------------------------------------------------------------------
def _abs_partial_kernel(x_ref, p_ref, *, block_rows, total_rows, need_mask):
    """Per-block partial sum of |x|, folded down to one (8, 128) tile.

    The hot loop is pure VPU work (abs + vreg adds) hidden under the block DMA;
    the cross-lane/sublane reduce of the tiny partials array happens outside.
    """
    xa = jnp.abs(x_ref[...].astype(jnp.float32))
    if need_mask:
        # Ragged last block: rows >= total_rows are out-of-bounds garbage.
        row_ids = (pl.program_id(0) * block_rows
                   + jax.lax.broadcasted_iota(jnp.int32, (block_rows, LANE), 0))
        xa = jnp.where(row_ids < total_rows, xa, 0.0)
    # Fold sublane-groups of 8 rows together with unrolled vreg adds (VPU only).
    folded = xa[0:SUBLANE, :]
    for k in range(1, block_rows // SUBLANE):
        folded = folded + xa[k * SUBLANE:(k + 1) * SUBLANE, :]
    p_ref[...] = folded


def _tern_kernel(t_ref, x_ref, o_ref):
    """Elementwise ternarization.

    (x >= t) - (x <= -t) is value-identical to sign(sign(x+t)+sign(x-t)) for
    t >= 0 (including the x == +/-t and t == 0 tie cases) but costs only two
    compares and a subtract per element.  Comparisons are done in f32.
    """
    t = t_ref[0]                                  # f32 scalar from SMEM
    xf = x_ref[...].astype(jnp.float32)
    pos = (xf >= t).astype(jnp.float32)
    neg = (xf <= -t).astype(jnp.float32)
    o_ref[...] = (pos - neg).astype(o_ref.dtype)
    # TODO(synk): output could be emitted as int8 to cut write-back traffic if
    # downstream consumers accept it; kept equal to the input dtype to match
    # the PyTorch module's semantics.


# ---------------------------------------------------------------------------
# Wrapper
# ---------------------------------------------------------------------------
def _to_lane_slab(x):
    """Flatten to a lane-dense (rows, 128) slab with rows a multiple of 8.

    The zero-pad copy is only materialized when numel is not already a
    multiple of 8*128 (static check), so the common case adds no HBM traffic.
    """
    n = x.size
    flat = x.reshape(-1)
    padded = _round_up(n, SUBLANE * LANE)
    pad = padded - n
    if pad:
        flat = jnp.pad(flat, (0, pad))
    return flat.reshape(-1, LANE), n, pad


def _abs_sum_pallas(x2d):
    """sum(|x|) via per-block (8,128) partials over a fully parallel grid."""
    rows = x2d.shape[0]
    block_rows = min(MAX_BLOCK_ROWS, rows)
    num_blocks = pl.cdiv(rows, block_rows)
    need_mask = (rows % block_rows) != 0
    kernel = functools.partial(
        _abs_partial_kernel,
        block_rows=block_rows, total_rows=rows, need_mask=need_mask)

    partials = pl.pallas_call(
        kernel,
        out_shape=jax.ShapeDtypeStruct((num_blocks * SUBLANE, LANE), jnp.float32),
        grid_spec=pltpu.PrefetchScalarGridSpec(
            num_scalar_prefetch=0,
            grid=(num_blocks,),
            in_specs=[pl.BlockSpec((block_rows, LANE), lambda i: (i, 0))],
            out_specs=pl.BlockSpec((SUBLANE, LANE), lambda i: (i, 0)),
        ),
        compiler_params=pltpu.CompilerParams(
            dimension_semantics=("parallel",)),
    )(x2d)
    # Tiny final reduction (num_blocks*8 x 128) done in plain XLA.
    return jnp.sum(partials)


@functools.partial(
    jax.jit,
    static_argnames=("threshold_value", "ternary_weight_networks", "clip_value"))
def ste_tern_pallas(x, threshold_value=0.05, ternary_weight_networks=False,
                    clip_value=1.0):
    # clip_value only affects the backward (STE) pass; the forward ignores it.
    # TODO(synk): backward STE clipping (torch.autograd.Function.backward) would
    # be added via jax.custom_vjp if gradients are needed.
    orig_shape = x.shape
    dtype = x.dtype

    x2d, n, pad = _to_lane_slab(x)
    rows = x2d.shape[0]
    block_rows = min(MAX_BLOCK_ROWS, rows)
    num_blocks = pl.cdiv(rows, block_rows)

    if ternary_weight_networks:
        # threshold = 0.7 * sum(|x|) / numel(x); zero padding adds nothing.
        thresh = (0.7 * _abs_sum_pallas(x2d) / jnp.float32(n)).reshape((1,))
    else:
        thresh = jnp.full((1,), threshold_value, dtype=jnp.float32)

    out2d = pl.pallas_call(
        _tern_kernel,
        out_shape=jax.ShapeDtypeStruct((rows, LANE), dtype),
        grid_spec=pltpu.PrefetchScalarGridSpec(
            num_scalar_prefetch=0,
            grid=(num_blocks,),
            in_specs=[
                pl.BlockSpec(memory_space=pltpu.MemorySpace.SMEM),   # (1,) threshold
                pl.BlockSpec((block_rows, LANE), lambda i: (i, 0)),  # x tile
            ],
            out_specs=pl.BlockSpec((block_rows, LANE), lambda i: (i, 0)),
        ),
        compiler_params=pltpu.CompilerParams(
            dimension_semantics=("parallel",)),
    )(thresh, x2d)

    if pad:
        return out2d.reshape(-1)[:n].reshape(orig_shape)
    return out2d.reshape(orig_shape)


# ---------------------------------------------------------------------------
# Pure-JAX reference + verification helpers
# ---------------------------------------------------------------------------
def ste_tern_ref(x, threshold_value=0.05, ternary_weight_networks=False):
    if ternary_weight_networks:
        t = 0.7 * jnp.sum(jnp.abs(x)) / x.size
    else:
        t = threshold_value
    return jnp.sign(jnp.sign(x + t) + jnp.sign(x - t))


def _assert_matches_ref(y, x, threshold_value=0.05,
                        ternary_weight_networks=False, tag=""):
    y_ref = ste_tern_ref(x, threshold_value, ternary_weight_networks)
    if ternary_weight_networks:
        # The Pallas reduction and jnp.sum use different summation orders, so
        # elements within float-rounding distance of the threshold may legally
        # classify differently; exclude that measure-zero band from the check.
        t = 0.7 * jnp.sum(jnp.abs(x)) / x.size
        decisive = jnp.abs(jnp.abs(x) - t) > 1e-5 * jnp.maximum(t, 1.0)
        ok = jnp.all(jnp.where(decisive, y == y_ref, True))
    else:
        ok = jnp.array_equal(y, y_ref)
    assert bool(ok), f"mismatch: {tag}"


if __name__ == "__main__":
    key = jax.random.PRNGKey(0)

    # NCHW-style input, matching the typical conv-activation use of STETern.
    x = jax.random.normal(key, (2, 4, 16, 16), dtype=jnp.float32) * 0.2

    # Default mode (fixed threshold).
    y = ste_tern_pallas(x, threshold_value=0.05, ternary_weight_networks=False)
    jax.block_until_ready(y)
    assert y.shape == x.shape and y.dtype == x.dtype
    _assert_matches_ref(y, x, 0.05, False, tag="default")

    # Ternary-weight-networks mode (data-dependent threshold via Pallas reduce).
    y2 = ste_tern_pallas(x, ternary_weight_networks=True)
    jax.block_until_ready(y2)
    _assert_matches_ref(y2, x, ternary_weight_networks=True, tag="twn")

    # Multi-block + ragged-last-block path (rows > block and rows % block != 0).
    x3 = jax.random.normal(jax.random.PRNGKey(1), (1, 3, 160, 160),
                           dtype=jnp.float32) * 0.1
    y3 = ste_tern_pallas(x3, ternary_weight_networks=True)
    jax.block_until_ready(y3)
    _assert_matches_ref(y3, x3, ternary_weight_networks=True, tag="twn-ragged")

    # numel not a multiple of 8*128 (pad fallback path).
    x4 = jax.random.normal(jax.random.PRNGKey(2), (3, 5, 7, 11),
                           dtype=jnp.float32) * 0.3
    y4 = ste_tern_pallas(x4, threshold_value=0.1)
    jax.block_until_ready(y4)
    _assert_matches_ref(y4, x4, threshold_value=0.1, tag="default-pad")

    print("KERNEL_OK")
</pallas_src>

<mosaic_0001>
module attributes {stable_mosaic.version = 11 : i64} {
  func.func @_tern_kernel(%arg0: i32, %arg1: memref<1xf32, #tpu.memory_space<smem>>, %arg2: memref<16x128xf32, #tpu.memory_space<vmem>>, %arg3: memref<16x128xf32, #tpu.memory_space<vmem>>) attributes {dimension_semantics = [#tpu.dimension_semantics<parallel>], iteration_bounds = array<i64: 1>, scalar_prefetch = 0 : i64, scratch_operands = 0 : i64, tpu.core_type = #tpu.core_type<tc>, window_params = [{transform_indices = @transform_0, window_bounds = array<i64: 1>}, {transform_indices = @transform_1, window_bounds = array<i64: 16, 128>}, {transform_indices = @transform_2, window_bounds = array<i64: 16, 128>}]} {
    %c0 = arith.constant 0 : index
    %0 = memref.load %arg1[%c0] : memref<1xf32, #tpu.memory_space<smem>>
    %c0_0 = arith.constant 0 : index
    %c0_1 = arith.constant 0 : index
    %1 = vector.load %arg2[%c0_0, %c0_1] : memref<16x128xf32, #tpu.memory_space<vmem>>, vector<16x128xf32>
    %2 = vector.broadcast %0 : f32 to vector<16x128xf32>
    %3 = arith.cmpf oge, %1, %2 : vector<16x128xf32>
    %4 = arith.extui %3 : vector<16x128xi1> to vector<16x128xi32>
    %5 = arith.sitofp %4 : vector<16x128xi32> to vector<16x128xf32>
    %cst = arith.constant 0.000000e+00 : f32
    %6 = arith.subf %cst, %0 : f32
    %7 = vector.broadcast %6 : f32 to vector<16x128xf32>
    %8 = arith.cmpf ole, %1, %7 : vector<16x128xf32>
    %9 = arith.extui %8 : vector<16x128xi1> to vector<16x128xi32>
    %10 = arith.sitofp %9 : vector<16x128xi32> to vector<16x128xf32>
    %11 = arith.subf %5, %10 : vector<16x128xf32>
    %c0_2 = arith.constant 0 : index
    %c0_3 = arith.constant 0 : index
    %12 = vector.load %arg3[%c0_2, %c0_3] : memref<16x128xf32, #tpu.memory_space<vmem>>, vector<16x128xf32>
    tpu.vector_store %arg3[%c0_2, %c0_3], %11 {strides = array<i32>} : memref<16x128xf32, #tpu.memory_space<vmem>>, vector<16x128xf32>,
    return
  }
  func.func @transform_0(%arg0: i32) -> i32 {
    %c0_i32 = arith.constant 0 : i32
    %c0_i32_0 = arith.constant 0 : i32
    return %c0_i32 : i32
  }
  func.func @transform_1(%arg0: i32) -> (i32, i32) {
    %c0_i32 = arith.constant 0 : i32
    %c0_i32_0 = arith.constant 0 : i32
    return %arg0, %c0_i32 : i32, i32
  }
  func.func @transform_2(%arg0: i32) -> (i32, i32) {
    %c0_i32 = arith.constant 0 : i32
    %c0_i32_0 = arith.constant 0 : i32
    return %arg0, %c0_i32 : i32, i32
  }
}

</mosaic_0001>

<llo_original>
// kernel: ste_tern_pallas.1
$region0: #{ste_tern_pallas.1}
  #allocation0 [shape = 'u32[]', space=smem, size = 0x4, offset = 0x4, fixed_abs, tag = 'smem constant byte address 0x4 - core index']
  #allocation1 [shape = 'u32[144,128]{1,0:T(1,128)}', space=vmem, size = 0x12000, scoped, tag = 'internal scratch']
  #allocation2 [shape = 'f32[1]{0:T(128)S(6)}', space=smem, size = 0x200, scoped, tag = 'scoped memory for ste_tern_pallas.1']
  %s0 = inlined_call_operand.<no memory space> [shape: f32[1], index: 0, kind: input, shape index: {}]
  %s1 = inlined_call_operand.vmem [shape: f32[16,128], index: 1, kind: input, shape index: {}]
  %s2 = inlined_call_operand.vmem [shape: f32[16,128], index: 2, kind: output, shape index: {}]
  %s3 = sld [smem:[#allocation0]]
  $region18: #{ste_tern_pallas.1} parent=0
    _
  %s5 = ssub.s32 1, %s3
  %s6 = scalar_select 0, %s5, %s3
  %7 = sst [smem:[#allocation2]] %s0
  // Predicated region
  $region2: #{ste_tern_pallas.1} parent=0 // pred_check
    _
  $region3: #{ste_tern_pallas.1} parent=0 // pred_check_branch
    %9 = sbr.rel (0) target = $region5
  $region4: #{ste_tern_pallas.1} parent=0 // pred_region
    _
  $region5: #{ste_tern_pallas.1} parent=0 // pred_fallthru
    _
  // Predicated region
  $region6: #{ste_tern_pallas.1} parent=0 // pred_check
    _
  $region7: #{ste_tern_pallas.1} parent=0 // pred_check_branch
    %11 = sbr.rel (0) target = $region9
  $region8: #{ste_tern_pallas.1} parent=0 // pred_region
    _
  $region9: #{ste_tern_pallas.1} parent=0 // pred_fallthru
    _
  %s12 = sld [smem:[#allocation2]]
  %v13 = vld [vmem:[%s1] sm:$0xff]
  %v14 = vld [vmem:[%s1 + $0x8] sm:$0xff]
  %v15 = vstv %s12
  %vm16 = vcmp.ge.f32.partialorder %v13, %v15
  %vm17 = vcmp.ge.f32.partialorder %v14, %v15
  %v18 = vsel %vm16, 1, 0
  %v19 = vsel %vm17, 1, 0
  %v20 = vcvt.s32.f32 %v18
  %v21 = vcvt.s32.f32 %v19
  %s22 = ssub.f32 0.0, %s12
  %v23 = vstv %s22
  %vm24 = vcmp.le.f32.partialorder %v13, %v23
  %vm25 = vcmp.le.f32.partialorder %v14, %v23
  %v26 = vsel %vm24, 1, 0
  %v27 = vsel %vm25, 1, 0
  %v28 = vcvt.s32.f32 %v26
  %v29 = vcvt.s32.f32 %v27
  %v30 = vsub.f32 %v20, %v28
  %v31 = vsub.f32 %v21, %v29
  %32 = vst [vmem:[%s2] sm:$0xff] %v30
  %33 = vst [vmem:[%s2 + $0x8] sm:$0xff] %v31
  // Predicated region
  $region10: #{ste_tern_pallas.1} parent=0 // pred_check
    _
  $region11: #{ste_tern_pallas.1} parent=0 // pred_check_branch
    %35 = sbr.rel (0) target = $region13
  $region12: #{ste_tern_pallas.1} parent=0 // pred_region
    _
  $region13: #{ste_tern_pallas.1} parent=0 // pred_fallthru
    _
  // Predicated region
  $region14: #{ste_tern_pallas.1} parent=0 // pred_check
    _
  $region15: #{ste_tern_pallas.1} parent=0 // pred_check_branch
    %37 = sbr.rel (0) target = $region17
  $region16: #{ste_tern_pallas.1} parent=0 // pred_region
    _
  $region17: #{ste_tern_pallas.1} parent=0 // pred_fallthru
    _

</llo_original>
